<compile_context>
chip_gen: v5e
topology: v5e:2x2
jax: 0.10.0
libtpu: 0.0.40
codegen_flags: <defaults>
</compile_context>

<pallas_src>
import math

import jax
import jax.numpy as jnp
from jax import lax
from jax.experimental import pallas as pl
from jax.experimental.pallas import tpu as pltpu


# ----------------------------------------------------------------------------
# Kernel
# ----------------------------------------------------------------------------

def _make_kernel(*, project_in_kernel, compute_dtype, L_total, TL, needs_mask):
    """Build the fused streaming kernel.

    Grid = (batch tiles, key-length tiles).  Per step it loads one
    (bt, TL, E) tile of k and updates an online softmax (m, l, acc scratch).
    On the last L step it normalizes and (optionally) applies the fused
    projection on the MXU.  Raw score logits are written per (b, l) block.
    """

    def kernel(*refs):
        if project_in_kernel:
            (k_ref, weff_ref, wkp_ref, beff_ref,
             out_ref, logit_ref, m_sc, l_sc, acc_sc) = refs
        else:
            (k_ref, weff_ref,
             out_ref, logit_ref, m_sc, l_sc, acc_sc) = refs
            wkp_ref = beff_ref = None

        l_idx = pl.program_id(1)
        n_l = pl.num_programs(1)

        @pl.when(l_idx == 0)
        def _():
            m_sc[...] = jnp.full(m_sc.shape, -jnp.inf, m_sc.dtype)
            l_sc[...] = jnp.zeros(l_sc.shape, l_sc.dtype)
            acc_sc[...] = jnp.zeros(acc_sc.shape, acc_sc.dtype)

        # bf16 elementwise math on v6e/v7x, f32 on v5e (no bf16 VPU there).
        kc = k_ref[...].astype(compute_dtype)           # (bt, TL, E)
        wc = weff_ref[...].astype(compute_dtype)        # (1, E)

        if needs_mask:
            # Partial last L tile: kill garbage rows so they cannot poison the
            # running max / denominator / context (NaN-safe: select, not mul).
            col = l_idx * TL + lax.broadcasted_iota(
                jnp.int32, (kc.shape[0], TL), 1)         # (bt, TL)
            valid = col < L_total
            kc = jnp.where(valid[:, :, None], kc, jnp.zeros_like(kc))

        # score logits: per-row dot(k_row, w_eff) -> VPU multiply + f32 reduce.
        logits = jnp.sum((kc * wc[None, :, :]).astype(jnp.float32), axis=-1)
        if needs_mask:
            logits = jnp.where(valid, logits, -jnp.inf)

        # Raw logits per (b, l) block; softmax is a tiny epilogue in XLA.
        logit_ref[...] = logits.astype(logit_ref.dtype)

        # Online softmax update (state in f32).
        m_prev = m_sc[...]                               # (bt, 1)
        m_new = jnp.maximum(m_prev, jnp.max(logits, axis=-1, keepdims=True))
        alpha = jnp.exp(m_prev - m_new)                  # (bt, 1)
        p = jnp.exp(logits - m_new)                      # (bt, TL) f32
        l_sc[...] = alpha * l_sc[...] + jnp.sum(p, axis=-1, keepdims=True)
        pk = (p.astype(compute_dtype)[:, :, None] * kc).astype(jnp.float32)
        acc_sc[...] = alpha * acc_sc[...] + jnp.sum(pk, axis=1)   # (bt, E)
        m_sc[...] = m_new

        @pl.when(l_idx == n_l - 1)
        def _():
            # Exact reciprocal: keeps the bk fusion identity tight and is free
            # in an HBM-bound kernel.
            ctx = acc_sc[...] * (1.0 / l_sc[...])        # (bt, E) f32
            if project_in_kernel:
                # MXU matmul with native (bf16) operands, f32 accumulation.
                out = jnp.dot(ctx.astype(wkp_ref.dtype), wkp_ref[...],
                              preferred_element_type=jnp.float32)
                out = out + beff_ref[...]
                out_ref[...] = out.astype(out_ref.dtype)
            else:
                out_ref[...] = ctx.astype(out_ref.dtype)

    return kernel


# ----------------------------------------------------------------------------
# Tiling / VMEM planner (generation aware)
# ----------------------------------------------------------------------------

def _plan(B, L, E, itemsize, block_b=None, block_l=None):
    try:
        vmem_cap = int(pltpu.get_tpu_info().vmem_capacity_bytes)
    except Exception:
        vmem_cap = 64 * 1024 * 1024          # conservative: v7x per-core VMEM
    budget = min(int(0.70 * vmem_cap), 48 * 1024 * 1024)

    # Hoist the (E,E) projection out of the kernel when its tile would eat a
    # large fraction of VMEM (mainly a v7x / huge-E concern).
    project_in_kernel = (2 * E * E * itemsize) <= budget // 3

    fixed = 8 * max(E, 128) * (itemsize + 4)             # w_eff + b_eff (padded)
    if project_in_kernel:
        fixed += E * E * itemsize                        # single-buffered Wk@Wp
    avail = max(budget - fixed, 1 << 20)

    def row_bytes(tl):
        return (2 * tl * E * itemsize        # double-buffered k tile
                + 3 * tl * E * 4             # f32 temporaries of the 2 VPU reduces
                + 2 * E * 4                  # double-buffered out block
                + 2 * max(tl, 128) * 4       # double-buffered logits block
                + (E + 256) * 4)             # m/l/acc scratch per row

    bt_min = B if B <= 8 else 8

    # --- key-length tile (multiple of 128 when tiling is needed) ---
    if block_l is not None:
        TL = int(block_l)
    elif bt_min * row_bytes(L) <= avail:
        TL = L
    else:
        slope = 2 * E * itemsize + 3 * E * 4 + 2 * 4
        const = 2 * E * 4 + 2 * 128 * 4 + (E + 256) * 4
        tl_max = max((avail // bt_min - const) // max(slope, 1), 1)
        TL = max(128, (tl_max // 128) * 128)
        if TL >= L:
            TL = L

    # --- batch tile ---
    if block_b is not None:
        bt = int(block_b)
    elif B <= 8:
        bt = B
    else:
        bt = min(B, max(8, avail // row_bytes(TL)))
        bt = max(8, (bt // 8) * 8)
        if B >= 16:
            # keep >=2 steps on the "parallel" axis (2 TensorCores on v7x)
            half = (((B + 1) // 2) + 7) // 8 * 8
            bt = min(bt, half)
    bt = max(1, min(bt, B))

    need = 2 * fixed + bt * row_bytes(TL) + (4 << 20)
    vmem_limit = int(min(int(0.92 * vmem_cap), max(need, 32 << 20)))
    return bt, TL, project_in_kernel, vmem_limit


# ----------------------------------------------------------------------------
# pallas_call builder
# ----------------------------------------------------------------------------

def _call_pallas(k_in, w_eff_in, wkp_in, b_eff, *, bt, TL, project_in_kernel,
                 compute_dtype, vmem_limit, single_buffer_consts):
    B, L, E = k_in.shape
    grid = (pl.cdiv(B, bt), pl.cdiv(L, TL))
    needs_mask = (L % TL) != 0

    kernel = _make_kernel(project_in_kernel=project_in_kernel,
                          compute_dtype=compute_dtype,
                          L_total=L, TL=TL, needs_mask=needs_mask)

    def const_spec(shape):
        # Constant-index operands: single buffering saves VMEM (no re-DMA).
        if single_buffer_consts:
            return pl.BlockSpec(shape, lambda b, l: (0, 0),
                                pipeline_mode=pl.Buffered(1))
        return pl.BlockSpec(shape, lambda b, l: (0, 0))

    in_specs = [pl.BlockSpec((bt, TL, E), lambda b, l: (b, l, 0)),
                const_spec((1, E))]
    inputs = [k_in, w_eff_in]
    if project_in_kernel:
        in_specs += [const_spec((E, E)), const_spec((1, E))]
        inputs += [wkp_in, b_eff]

    out_specs = [pl.BlockSpec((bt, E), lambda b, l: (b, 0)),    # out / ctx
                 pl.BlockSpec((bt, TL), lambda b, l: (b, l))]   # score logits
    out_shape = (jax.ShapeDtypeStruct((B, E), jnp.float32),
                 jax.ShapeDtypeStruct((B, L), jnp.float32))

    grid_spec = pltpu.PrefetchScalarGridSpec(
        num_scalar_prefetch=0,
        grid=grid,
        in_specs=in_specs,
        out_specs=out_specs,
        scratch_shapes=[pltpu.VMEM((bt, 1), jnp.float32),   # running max
                        pltpu.VMEM((bt, 1), jnp.float32),   # running denom
                        pltpu.VMEM((bt, E), jnp.float32)],  # context accum
    )

    return pl.pallas_call(
        kernel,
        grid_spec=grid_spec,
        out_shape=out_shape,
        compiler_params=pltpu.CompilerParams(
            dimension_semantics=("parallel", "arbitrary"),
            vmem_limit_bytes=vmem_limit),
    )(*inputs)


# ----------------------------------------------------------------------------
# Public wrapper
# ----------------------------------------------------------------------------

def no_query_attention(k, q_param, wk, bk, wq, bq, wp, bp, *,
                       use_bf16=True, block_b=None, block_l=None):
    """k: (B, L, E). Linear weights stored pre-transposed as (in_dim, out_dim).
    Returns (output (B,1,E), score (B,1,L)) matching the PyTorch module
    (n_head=1, q_len=1, dot_product score, dropout=0)."""
    B, L, E = k.shape
    H = wk.shape[1]
    assert H == E, "n_head=1 default => hidden_dim == embed_dim"

    f32 = jnp.float32
    # Batch-invariant algebraic fusion (exact: dropout=0, softmax rows sum to 1;
    # the constant qx.bk logit term is dropped -- softmax is shift invariant).
    qx = q_param.astype(f32) @ wq.astype(f32) + bq.astype(f32)      # (1, H)
    w_eff = qx @ wk.astype(f32).T                                   # (1, E)
    wkp = wk.astype(f32) @ wp.astype(f32)                           # (E, E)
    b_eff = bk.astype(f32) @ wp.astype(f32) + bp.astype(f32)        # (1, E)

    store_dtype = jnp.bfloat16 if use_bf16 else jnp.float32
    try:
        device_kind = jax.devices()[0].device_kind.lower()
    except Exception:
        device_kind = ""
    # v5e has no bf16 VPU: upcast elementwise math to f32 there.
    compute_dtype = (jnp.float32 if ((not use_bf16) or ("v5" in device_kind))
                     else jnp.bfloat16)

    k_in = k.astype(store_dtype)
    w_eff_in = w_eff.astype(store_dtype)
    wkp_in = wkp.astype(store_dtype)

    bt, TL, project_in_kernel, vmem_limit = _plan(
        B, L, E, jnp.dtype(store_dtype).itemsize,
        block_b=block_b, block_l=block_l)

    kwargs = dict(bt=bt, TL=TL, project_in_kernel=project_in_kernel,
                  compute_dtype=compute_dtype, vmem_limit=vmem_limit)
    try:
        out2d, logits = _call_pallas(
            k_in, w_eff_in, wkp_in, b_eff,
            single_buffer_consts=hasattr(pl, "Buffered"), **kwargs)
    except Exception:
        # Fallback: default (double) buffering for the constant operands.
        out2d, logits = _call_pallas(
            k_in, w_eff_in, wkp_in, b_eff,
            single_buffer_consts=False, **kwargs)

    if not project_in_kernel:
        # Huge-E fallback: kernel returned ctx; projection runs in XLA.
        out2d = out2d @ wkp + b_eff

    # Tiny (B, L) epilogue: normalize the streamed logits into the score.
    score = jax.nn.softmax(logits, axis=-1)
    return out2d.reshape(B, 1, E), score.reshape(B, 1, L)


# ----------------------------------------------------------------------------
# Pure-JAX reference (mirrors the PyTorch forward, n_head=1, q_len=1)
# ----------------------------------------------------------------------------

def _reference(k, q_param, wk, bk, wq, bq, wp, bp):
    B = k.shape[0]
    q = jnp.broadcast_to(q_param[None, :, :], (B,) + q_param.shape)    # (B,1,E)
    kx = k @ wk + bk                                                   # (B,L,H)
    qx = q @ wq + bq                                                   # (B,1,H)
    score = jnp.einsum('bqh,bkh->bqk', qx, kx)                         # (B,1,L)
    score = jax.nn.softmax(score, axis=-1)
    out = jnp.einsum('bqk,bkh->bqh', score, kx)                        # (B,1,H)
    out = out @ wp + bp                                                # (B,1,E)
    return out, score


if __name__ == "__main__":
    def run_case(name, B, L, E, use_bf16, block_b=None, block_l=None,
                 atol=1e-4, rtol=1e-4):
        key = jax.random.PRNGKey(0)
        ks = jax.random.split(key, 8)
        stdv = 1.0 / math.sqrt(E)

        k_in = jax.random.normal(ks[0], (B, L, E), dtype=jnp.float32)
        q_param = jax.random.uniform(ks[1], (1, E), jnp.float32, -stdv, stdv)
        wk = jax.random.uniform(ks[2], (E, E), jnp.float32, -stdv, stdv)
        bk = jax.random.uniform(ks[3], (1, E), jnp.float32, -stdv, stdv)
        wq = jax.random.uniform(ks[4], (E, E), jnp.float32, -stdv, stdv)
        bq = jax.random.uniform(ks[5], (1, E), jnp.float32, -stdv, stdv)
        wp = jax.random.uniform(ks[6], (E, E), jnp.float32, -stdv, stdv)
        bp = jax.random.uniform(ks[7], (1, E), jnp.float32, -stdv, stdv)

        out, score = no_query_attention(k_in, q_param, wk, bk, wq, bq, wp, bp,
                                        use_bf16=use_bf16,
                                        block_b=block_b, block_l=block_l)
        out = jax.block_until_ready(out)
        score = jax.block_until_ready(score)

        ref_out, ref_score = _reference(k_in, q_param, wk, bk, wq, bq, wp, bp)
        assert out.shape == (B, 1, E) and score.shape == (B, 1, L), name
        assert jnp.allclose(out, ref_out, atol=atol, rtol=rtol), f"out mismatch: {name}"
        assert jnp.allclose(score, ref_score, atol=atol, rtol=rtol), f"score mismatch: {name}"

    # 1) small shape, f32 storage (tight tolerance, single grid step)
    run_case("f32-small", B=2, L=8, E=32, use_bf16=False, atol=1e-4, rtol=1e-4)
    # 2) small shape, default bf16 storage path
    run_case("bf16-small", B=2, L=8, E=32, use_bf16=True, atol=1e-2, rtol=5e-2)
    # 3) larger shape forcing batch tiling + L tiling (online softmax) + masking
    run_case("bf16-tiled", B=16, L=200, E=128, use_bf16=True,
             block_b=8, block_l=128, atol=1e-2, rtol=5e-2)

    print("KERNEL_OK")
</pallas_src>

<mosaic_0001>
module attributes {stable_mosaic.version = 11 : i64} {
  func.func @kernel(%arg0: i32, %arg1: i32, %arg2: memref<2x8x32xf32, #tpu.memory_space<vmem>>, %arg3: memref<1x32xf32, #tpu.memory_space<vmem>>, %arg4: memref<32x32xf32, #tpu.memory_space<vmem>>, %arg5: memref<1x32xf32, #tpu.memory_space<vmem>>, %arg6: memref<2x32xf32, #tpu.memory_space<vmem>>, %arg7: memref<2x8xf32, #tpu.memory_space<vmem>>, %arg8: memref<2x1xf32, #tpu.memory_space<vmem>>, %arg9: memref<2x1xf32, #tpu.memory_space<vmem>>, %arg10: memref<2x32xf32, #tpu.memory_space<vmem>>) attributes {dimension_semantics = [#tpu.dimension_semantics<parallel>, #tpu.dimension_semantics<arbitrary>], iteration_bounds = array<i64: 1, 1>, scalar_prefetch = 0 : i64, scratch_operands = 3 : i64, tpu.core_type = #tpu.core_type<tc>, window_params = [{transform_indices = @transform_0, window_bounds = array<i64: 2, 8, 32>}, {pipeline_mode = #tpu.pipeline_mode<synchronous>, transform_indices = @transform_1, window_bounds = array<i64: 1, 32>}, {pipeline_mode = #tpu.pipeline_mode<synchronous>, transform_indices = @transform_2, window_bounds = array<i64: 32, 32>}, {pipeline_mode = #tpu.pipeline_mode<synchronous>, transform_indices = @transform_3, window_bounds = array<i64: 1, 32>}, {transform_indices = @transform_4, window_bounds = array<i64: 2, 32>}, {transform_indices = @transform_5, window_bounds = array<i64: 2, 8>}]} {
    %c0_i32 = arith.constant 0 : i32
    %0 = arith.cmpi eq, %arg1, %c0_i32 : i32
    %1 = arith.extui %0 : i1 to i32
    %c0_i32_0 = arith.constant 0 : i32
    %2 = arith.cmpi ne, %1, %c0_i32_0 : i32
    scf.if %2 {
      %cst_24 = arith.constant 0xFF800000 : f32
      %38 = vector.broadcast %cst_24 : f32 to vector<2x1xf32>
      %c0_25 = arith.constant 0 : index
      %c0_26 = arith.constant 0 : index
      %39 = vector.load %arg8[%c0_25, %c0_26] : memref<2x1xf32, #tpu.memory_space<vmem>>, vector<2x1xf32>
      tpu.vector_store %arg8[%c0_25, %c0_26], %38 {strides = array<i32>} : memref<2x1xf32, #tpu.memory_space<vmem>>, vector<2x1xf32>,
      %cst_27 = arith.constant 0.000000e+00 : f32
      %40 = vector.broadcast %cst_27 : f32 to vector<2x1xf32>
      %c0_28 = arith.constant 0 : index
      %c0_29 = arith.constant 0 : index
      %41 = vector.load %arg9[%c0_28, %c0_29] : memref<2x1xf32, #tpu.memory_space<vmem>>, vector<2x1xf32>
      tpu.vector_store %arg9[%c0_28, %c0_29], %40 {strides = array<i32>} : memref<2x1xf32, #tpu.memory_space<vmem>>, vector<2x1xf32>,
      %cst_30 = arith.constant 0.000000e+00 : f32
      %42 = vector.broadcast %cst_30 : f32 to vector<2x32xf32>
      %c0_31 = arith.constant 0 : index
      %c0_32 = arith.constant 0 : index
      %43 = vector.load %arg10[%c0_31, %c0_32] : memref<2x32xf32, #tpu.memory_space<vmem>>, vector<2x32xf32>
      tpu.vector_store %arg10[%c0_31, %c0_32], %42 {strides = array<i32>} : memref<2x32xf32, #tpu.memory_space<vmem>>, vector<2x32xf32>,
    } else {
    }
    %c0 = arith.constant 0 : index
    %c0_1 = arith.constant 0 : index
    %c0_2 = arith.constant 0 : index
    %3 = vector.load %arg2[%c0, %c0_1, %c0_2] : memref<2x8x32xf32, #tpu.memory_space<vmem>>, vector<2x8x32xf32>
    %c0_3 = arith.constant 0 : index
    %c0_4 = arith.constant 0 : index
    %4 = vector.load %arg3[%c0_3, %c0_4] : memref<1x32xf32, #tpu.memory_space<vmem>>, vector<1x32xf32>
    %5 = vector.shape_cast %4 : vector<1x32xf32> to vector<1x1x32xf32>
    %6 = vector.broadcast %5 : vector<1x1x32xf32> to vector<2x8x32xf32>
    %7 = arith.mulf %3, %6 : vector<2x8x32xf32>
    %cst = arith.constant dense<0.000000e+00> : vector<2x8xf32>
    %8 = vector.multi_reduction <add>, %7, %cst [2] : vector<2x8x32xf32> to vector<2x8xf32>
    %c0_5 = arith.constant 0 : index
    %c0_6 = arith.constant 0 : index
    %9 = vector.load %arg7[%c0_5, %c0_6] : memref<2x8xf32, #tpu.memory_space<vmem>>, vector<2x8xf32>
    tpu.vector_store %arg7[%c0_5, %c0_6], %8 {strides = array<i32>} : memref<2x8xf32, #tpu.memory_space<vmem>>, vector<2x8xf32>,
    %c0_7 = arith.constant 0 : index
    %c0_8 = arith.constant 0 : index
    %10 = vector.load %arg8[%c0_7, %c0_8] : memref<2x1xf32, #tpu.memory_space<vmem>>, vector<2x1xf32>
    %cst_9 = arith.constant dense<0xFF800000> : vector<2xf32>
    %11 = vector.multi_reduction <maximumf>, %8, %cst_9 [1] : vector<2x8xf32> to vector<2xf32>
    %12 = vector.shape_cast %11 : vector<2xf32> to vector<2x1xf32>
    %13 = arith.maximumf %10, %12 : vector<2x1xf32>
    %14 = arith.subf %10, %13 : vector<2x1xf32>
    %15 = math.exp %14 : vector<2x1xf32>
    %16 = vector.broadcast %13 : vector<2x1xf32> to vector<2x8xf32>
    %17 = arith.subf %8, %16 : vector<2x8xf32>
    %18 = math.exp %17 : vector<2x8xf32>
    %c0_10 = arith.constant 0 : index
    %c0_11 = arith.constant 0 : index
    %19 = vector.load %arg9[%c0_10, %c0_11] : memref<2x1xf32, #tpu.memory_space<vmem>>, vector<2x1xf32>
    %20 = arith.mulf %15, %19 : vector<2x1xf32>
    %cst_12 = arith.constant dense<0.000000e+00> : vector<2xf32>
    %21 = vector.multi_reduction <add>, %18, %cst_12 [1] : vector<2x8xf32> to vector<2xf32>
    %22 = vector.shape_cast %21 : vector<2xf32> to vector<2x1xf32>
    %23 = arith.addf %20, %22 : vector<2x1xf32>
    %c0_13 = arith.constant 0 : index
    %c0_14 = arith.constant 0 : index
    %24 = vector.load %arg9[%c0_13, %c0_14] : memref<2x1xf32, #tpu.memory_space<vmem>>, vector<2x1xf32>
    tpu.vector_store %arg9[%c0_13, %c0_14], %23 {strides = array<i32>} : memref<2x1xf32, #tpu.memory_space<vmem>>, vector<2x1xf32>,
    %25 = vector.shape_cast %18 : vector<2x8xf32> to vector<2x8x1xf32>
    %26 = vector.broadcast %25 : vector<2x8x1xf32> to vector<2x8x32xf32>
    %27 = arith.mulf %26, %3 : vector<2x8x32xf32>
    %c0_15 = arith.constant 0 : index
    %c0_16 = arith.constant 0 : index
    %28 = vector.load %arg10[%c0_15, %c0_16] : memref<2x32xf32, #tpu.memory_space<vmem>>, vector<2x32xf32>
    %29 = vector.broadcast %15 : vector<2x1xf32> to vector<2x32xf32>
    %30 = arith.mulf %29, %28 : vector<2x32xf32>
    %cst_17 = arith.constant dense<0.000000e+00> : vector<2x32xf32>
    %31 = vector.multi_reduction <add>, %27, %cst_17 [1] : vector<2x8x32xf32> to vector<2x32xf32>
    %32 = arith.addf %30, %31 : vector<2x32xf32>
    %c0_18 = arith.constant 0 : index
    %c0_19 = arith.constant 0 : index
    %33 = vector.load %arg10[%c0_18, %c0_19] : memref<2x32xf32, #tpu.memory_space<vmem>>, vector<2x32xf32>
    tpu.vector_store %arg10[%c0_18, %c0_19], %32 {strides = array<i32>} : memref<2x32xf32, #tpu.memory_space<vmem>>, vector<2x32xf32>,
    %c0_20 = arith.constant 0 : index
    %c0_21 = arith.constant 0 : index
    %34 = vector.load %arg8[%c0_20, %c0_21] : memref<2x1xf32, #tpu.memory_space<vmem>>, vector<2x1xf32>
    tpu.vector_store %arg8[%c0_20, %c0_21], %13 {strides = array<i32>} : memref<2x1xf32, #tpu.memory_space<vmem>>, vector<2x1xf32>,
    %c0_i32_22 = arith.constant 0 : i32
    %35 = arith.cmpi eq, %arg1, %c0_i32_22 : i32
    %36 = arith.extui %35 : i1 to i32
    %c0_i32_23 = arith.constant 0 : i32
    %37 = arith.cmpi ne, %36, %c0_i32_23 : i32
    scf.if %37 {
      %c0_24 = arith.constant 0 : index
      %c0_25 = arith.constant 0 : index
      %38 = vector.load %arg10[%c0_24, %c0_25] : memref<2x32xf32, #tpu.memory_space<vmem>>, vector<2x32xf32>
      %c0_26 = arith.constant 0 : index
      %c0_27 = arith.constant 0 : index
      %39 = vector.load %arg9[%c0_26, %c0_27] : memref<2x1xf32, #tpu.memory_space<vmem>>, vector<2x1xf32>
      %cst_28 = arith.constant 1.000000e+00 : f32
      %40 = vector.broadcast %cst_28 : f32 to vector<2x1xf32>
      %41 = arith.divf %40, %39 : vector<2x1xf32>
      %42 = vector.broadcast %41 : vector<2x1xf32> to vector<2x32xf32>
      %43 = arith.mulf %38, %42 : vector<2x32xf32>
      %c0_29 = arith.constant 0 : index
      %c0_30 = arith.constant 0 : index
      %44 = vector.load %arg4[%c0_29, %c0_30] : memref<32x32xf32, #tpu.memory_space<vmem>>, vector<32x32xf32>
      %cst_31 = arith.constant dense<0.000000e+00> : vector<2x32xf32>
      %45 = tpu.matmul %43, %44, %cst_31 {dimension_numbers = #tpu.dot_dimension_numbers<[1], [0], [0], [1], [0, 0, 1, 1], [], []>} : vector<2x32xf32>, vector<32x32xf32>, vector<2x32xf32> -> vector<2x32xf32>
      %c0_32 = arith.constant 0 : index
      %c0_33 = arith.constant 0 : index
      %46 = vector.load %arg5[%c0_32, %c0_33] : memref<1x32xf32, #tpu.memory_space<vmem>>, vector<1x32xf32>
      %47 = vector.broadcast %46 : vector<1x32xf32> to vector<2x32xf32>
      %48 = arith.addf %45, %47 : vector<2x32xf32>
      %c0_34 = arith.constant 0 : index
      %c0_35 = arith.constant 0 : index
      %49 = vector.load %arg6[%c0_34, %c0_35] : memref<2x32xf32, #tpu.memory_space<vmem>>, vector<2x32xf32>
      tpu.vector_store %arg6[%c0_34, %c0_35], %48 {strides = array<i32>} : memref<2x32xf32, #tpu.memory_space<vmem>>, vector<2x32xf32>,
    } else {
    }
    return
  }
  func.func @transform_0(%arg0: i32, %arg1: i32) -> (i32, i32, i32) {
    %c0_i32 = arith.constant 0 : i32
    %c0_i32_0 = arith.constant 0 : i32
    return %arg0, %arg1, %c0_i32 : i32, i32, i32
  }
  func.func @transform_1(%arg0: i32, %arg1: i32) -> (i32, i32) {
    %c0_i32 = arith.constant 0 : i32
    %c0_i32_0 = arith.constant 0 : i32
    %c0_i32_1 = arith.constant 0 : i32
    return %c0_i32, %c0_i32_0 : i32, i32
  }
  func.func @transform_2(%arg0: i32, %arg1: i32) -> (i32, i32) {
    %c0_i32 = arith.constant 0 : i32
    %c0_i32_0 = arith.constant 0 : i32
    %c0_i32_1 = arith.constant 0 : i32
    return %c0_i32, %c0_i32_0 : i32, i32
  }
  func.func @transform_3(%arg0: i32, %arg1: i32) -> (i32, i32) {
    %c0_i32 = arith.constant 0 : i32
    %c0_i32_0 = arith.constant 0 : i32
    %c0_i32_1 = arith.constant 0 : i32
    return %c0_i32, %c0_i32_0 : i32, i32
  }
  func.func @transform_4(%arg0: i32, %arg1: i32) -> (i32, i32) {
    %c0_i32 = arith.constant 0 : i32
    %c0_i32_0 = arith.constant 0 : i32
    return %arg0, %c0_i32 : i32, i32
  }
  func.func @transform_5(%arg0: i32, %arg1: i32) -> (i32, i32) {
    %c0_i32 = arith.constant 0 : i32
    return %arg0, %arg1 : i32, i32
  }
}

module attributes {stable_mosaic.version = 11 : i64} {
  func.func @kernel(%arg0: i32, %arg1: i32, %arg2: memref<2x8x32xf32, #tpu.memory_space<vmem>>, %arg3: memref<1x32xf32, #tpu.memory_space<vmem>>, %arg4: memref<32x32xf32, #tpu.memory_space<vmem>>, %arg5: memref<1x32xf32, #tpu.memory_space<vmem>>, %arg6: memref<2x32xf32, #tpu.memory_space<vmem>>, %arg7: memref<2x8xf32, #tpu.memory_space<vmem>>, %arg8: memref<2x1xf32, #tpu.memory_space<vmem>>, %arg9: memref<2x1xf32, #tpu.memory_space<vmem>>, %arg10: memref<2x32xf32, #tpu.memory_space<vmem>>) attributes {dimension_semantics = [#tpu.dimension_semantics<parallel>, #tpu.dimension_semantics<arbitrary>], iteration_bounds = array<i64: 1, 1>, scalar_prefetch = 0 : i64, scratch_operands = 3 : i64, tpu.core_type = #tpu.core_type<tc>, window_params = [{transform_indices = @transform_0, window_bounds = array<i64: 2, 8, 32>}, {pipeline_mode = #tpu.pipeline_mode<synchronous>, transform_indices = @transform_1, window_bounds = array<i64: 1, 32>}, {pipeline_mode = #tpu.pipeline_mode<synchronous>, transform_indices = @transform_2, window_bounds = array<i64: 32, 32>}, {pipeline_mode = #tpu.pipeline_mode<synchronous>, transform_indices = @transform_3, window_bounds = array<i64: 1, 32>}, {transform_indices = @transform_4, window_bounds = array<i64: 2, 32>}, {transform_indices = @transform_5, window_bounds = array<i64: 2, 8>}]} {
    %c0_i32 = arith.constant 0 : i32
    %0 = arith.cmpi eq, %arg1, %c0_i32 : i32
    %1 = arith.extui %0 : i1 to i32
    %c0_i32_0 = arith.constant 0 : i32
    %2 = arith.cmpi ne, %1, %c0_i32_0 : i32
    scf.if %2 {
      %cst_24 = arith.constant 0xFF800000 : f32
      %38 = vector.broadcast %cst_24 : f32 to vector<2x1xf32>
      %c0_25 = arith.constant 0 : index
      %c0_26 = arith.constant 0 : index
      %39 = vector.load %arg8[%c0_25, %c0_26] : memref<2x1xf32, #tpu.memory_space<vmem>>, vector<2x1xf32>
      tpu.vector_store %arg8[%c0_25, %c0_26], %38 {strides = array<i32>} : memref<2x1xf32, #tpu.memory_space<vmem>>, vector<2x1xf32>,
      %cst_27 = arith.constant 0.000000e+00 : f32
      %40 = vector.broadcast %cst_27 : f32 to vector<2x1xf32>
      %c0_28 = arith.constant 0 : index
      %c0_29 = arith.constant 0 : index
      %41 = vector.load %arg9[%c0_28, %c0_29] : memref<2x1xf32, #tpu.memory_space<vmem>>, vector<2x1xf32>
      tpu.vector_store %arg9[%c0_28, %c0_29], %40 {strides = array<i32>} : memref<2x1xf32, #tpu.memory_space<vmem>>, vector<2x1xf32>,
      %cst_30 = arith.constant 0.000000e+00 : f32
      %42 = vector.broadcast %cst_30 : f32 to vector<2x32xf32>
      %c0_31 = arith.constant 0 : index
      %c0_32 = arith.constant 0 : index
      %43 = vector.load %arg10[%c0_31, %c0_32] : memref<2x32xf32, #tpu.memory_space<vmem>>, vector<2x32xf32>
      tpu.vector_store %arg10[%c0_31, %c0_32], %42 {strides = array<i32>} : memref<2x32xf32, #tpu.memory_space<vmem>>, vector<2x32xf32>,
    } else {
    }
    %c0 = arith.constant 0 : index
    %c0_1 = arith.constant 0 : index
    %c0_2 = arith.constant 0 : index
    %3 = vector.load %arg2[%c0, %c0_1, %c0_2] : memref<2x8x32xf32, #tpu.memory_space<vmem>>, vector<2x8x32xf32>
    %c0_3 = arith.constant 0 : index
    %c0_4 = arith.constant 0 : index
    %4 = vector.load %arg3[%c0_3, %c0_4] : memref<1x32xf32, #tpu.memory_space<vmem>>, vector<1x32xf32>
    %5 = vector.shape_cast %4 : vector<1x32xf32> to vector<1x1x32xf32>
    %6 = vector.broadcast %5 : vector<1x1x32xf32> to vector<2x8x32xf32>
    %7 = arith.mulf %3, %6 : vector<2x8x32xf32>
    %cst = arith.constant dense<0.000000e+00> : vector<2x8xf32>
    %8 = vector.multi_reduction <add>, %7, %cst [2] : vector<2x8x32xf32> to vector<2x8xf32>
    %c0_5 = arith.constant 0 : index
    %c0_6 = arith.constant 0 : index
    %9 = vector.load %arg7[%c0_5, %c0_6] : memref<2x8xf32, #tpu.memory_space<vmem>>, vector<2x8xf32>
    tpu.vector_store %arg7[%c0_5, %c0_6], %8 {strides = array<i32>} : memref<2x8xf32, #tpu.memory_space<vmem>>, vector<2x8xf32>,
    %c0_7 = arith.constant 0 : index
    %c0_8 = arith.constant 0 : index
    %10 = vector.load %arg8[%c0_7, %c0_8] : memref<2x1xf32, #tpu.memory_space<vmem>>, vector<2x1xf32>
    %cst_9 = arith.constant dense<0xFF800000> : vector<2xf32>
    %11 = vector.multi_reduction <maximumf>, %8, %cst_9 [1] : vector<2x8xf32> to vector<2xf32>
    %12 = vector.shape_cast %11 : vector<2xf32> to vector<2x1xf32>
    %13 = arith.maximumf %10, %12 : vector<2x1xf32>
    %14 = arith.subf %10, %13 : vector<2x1xf32>
    %15 = math.exp %14 : vector<2x1xf32>
    %16 = vector.broadcast %13 : vector<2x1xf32> to vector<2x8xf32>
    %17 = arith.subf %8, %16 : vector<2x8xf32>
    %18 = math.exp %17 : vector<2x8xf32>
    %c0_10 = arith.constant 0 : index
    %c0_11 = arith.constant 0 : index
    %19 = vector.load %arg9[%c0_10, %c0_11] : memref<2x1xf32, #tpu.memory_space<vmem>>, vector<2x1xf32>
    %20 = arith.mulf %15, %19 : vector<2x1xf32>
    %cst_12 = arith.constant dense<0.000000e+00> : vector<2xf32>
    %21 = vector.multi_reduction <add>, %18, %cst_12 [1] : vector<2x8xf32> to vector<2xf32>
    %22 = vector.shape_cast %21 : vector<2xf32> to vector<2x1xf32>
    %23 = arith.addf %20, %22 : vector<2x1xf32>
    %c0_13 = arith.constant 0 : index
    %c0_14 = arith.constant 0 : index
    %24 = vector.load %arg9[%c0_13, %c0_14] : memref<2x1xf32, #tpu.memory_space<vmem>>, vector<2x1xf32>
    tpu.vector_store %arg9[%c0_13, %c0_14], %23 {strides = array<i32>} : memref<2x1xf32, #tpu.memory_space<vmem>>, vector<2x1xf32>,
    %25 = vector.shape_cast %18 : vector<2x8xf32> to vector<2x8x1xf32>
    %26 = vector.broadcast %25 : vector<2x8x1xf32> to vector<2x8x32xf32>
    %27 = arith.mulf %26, %3 : vector<2x8x32xf32>
    %c0_15 = arith.constant 0 : index
    %c0_16 = arith.constant 0 : index
    %28 = vector.load %arg10[%c0_15, %c0_16] : memref<2x32xf32, #tpu.memory_space<vmem>>, vector<2x32xf32>
    %29 = vector.broadcast %15 : vector<2x1xf32> to vector<2x32xf32>
    %30 = arith.mulf %29, %28 : vector<2x32xf32>
    %cst_17 = arith.constant dense<0.000000e+00> : vector<2x32xf32>
    %31 = vector.multi_reduction <add>, %27, %cst_17 [1] : vector<2x8x32xf32> to vector<2x32xf32>
    %32 = arith.addf %30, %31 : vector<2x32xf32>
    %c0_18 = arith.constant 0 : index
    %c0_19 = arith.constant 0 : index
    %33 = vector.load %arg10[%c0_18, %c0_19] : memref<2x32xf32, #tpu.memory_space<vmem>>, vector<2x32xf32>
    tpu.vector_store %arg10[%c0_18, %c0_19], %32 {strides = array<i32>} : memref<2x32xf32, #tpu.memory_space<vmem>>, vector<2x32xf32>,
    %c0_20 = arith.constant 0 : index
    %c0_21 = arith.constant 0 : index
    %34 = vector.load %arg8[%c0_20, %c0_21] : memref<2x1xf32, #tpu.memory_space<vmem>>, vector<2x1xf32>
    tpu.vector_store %arg8[%c0_20, %c0_21], %13 {strides = array<i32>} : memref<2x1xf32, #tpu.memory_space<vmem>>, vector<2x1xf32>,
    %c0_i32_22 = arith.constant 0 : i32
    %35 = arith.cmpi eq, %arg1, %c0_i32_22 : i32
    %36 = arith.extui %35 : i1 to i32
    %c0_i32_23 = arith.constant 0 : i32
    %37 = arith.cmpi ne, %36, %c0_i32_23 : i32
    scf.if %37 {
      %c0_24 = arith.constant 0 : index
      %c0_25 = arith.constant 0 : index
      %38 = vector.load %arg10[%c0_24, %c0_25] : memref<2x32xf32, #tpu.memory_space<vmem>>, vector<2x32xf32>
      %c0_26 = arith.constant 0 : index
      %c0_27 = arith.constant 0 : index
      %39 = vector.load %arg9[%c0_26, %c0_27] : memref<2x1xf32, #tpu.memory_space<vmem>>, vector<2x1xf32>
      %cst_28 = arith.constant 1.000000e+00 : f32
      %40 = vector.broadcast %cst_28 : f32 to vector<2x1xf32>
      %41 = arith.divf %40, %39 : vector<2x1xf32>
      %42 = vector.broadcast %41 : vector<2x1xf32> to vector<2x32xf32>
      %43 = arith.mulf %38, %42 : vector<2x32xf32>
      %c0_29 = arith.constant 0 : index
      %c0_30 = arith.constant 0 : index
      %44 = vector.load %arg4[%c0_29, %c0_30] : memref<32x32xf32, #tpu.memory_space<vmem>>, vector<32x32xf32>
      %cst_31 = arith.constant dense<0.000000e+00> : vector<2x32xf32>
      %45 = tpu.matmul %43, %44, %cst_31 {dimension_numbers = #tpu.dot_dimension_numbers<[1], [0], [0], [1], [0, 0, 1, 1], [], []>} : vector<2x32xf32>, vector<32x32xf32>, vector<2x32xf32> -> vector<2x32xf32>
      %c0_32 = arith.constant 0 : index
      %c0_33 = arith.constant 0 : index
      %46 = vector.load %arg5[%c0_32, %c0_33] : memref<1x32xf32, #tpu.memory_space<vmem>>, vector<1x32xf32>
      %47 = vector.broadcast %46 : vector<1x32xf32> to vector<2x32xf32>
      %48 = arith.addf %45, %47 : vector<2x32xf32>
      %c0_34 = arith.constant 0 : index
      %c0_35 = arith.constant 0 : index
      %49 = vector.load %arg6[%c0_34, %c0_35] : memref<2x32xf32, #tpu.memory_space<vmem>>, vector<2x32xf32>
      tpu.vector_store %arg6[%c0_34, %c0_35], %48 {strides = array<i32>} : memref<2x32xf32, #tpu.memory_space<vmem>>, vector<2x32xf32>,
    } else {
    }
    return
  }
  func.func @transform_0(%arg0: i32, %arg1: i32) -> (i32, i32, i32) {
    %c0_i32 = arith.constant 0 : i32
    %c0_i32_0 = arith.constant 0 : i32
    return %arg0, %arg1, %c0_i32 : i32, i32, i32
  }
  func.func @transform_1(%arg0: i32, %arg1: i32) -> (i32, i32) {
    %c0_i32 = arith.constant 0 : i32
    %c0_i32_0 = arith.constant 0 : i32
    %c0_i32_1 = arith.constant 0 : i32
    return %c0_i32, %c0_i32_0 : i32, i32
  }
  func.func @transform_2(%arg0: i32, %arg1: i32) -> (i32, i32) {
    %c0_i32 = arith.constant 0 : i32
    %c0_i32_0 = arith.constant 0 : i32
    %c0_i32_1 = arith.constant 0 : i32
    return %c0_i32, %c0_i32_0 : i32, i32
  }
  func.func @transform_3(%arg0: i32, %arg1: i32) -> (i32, i32) {
    %c0_i32 = arith.constant 0 : i32
    %c0_i32_0 = arith.constant 0 : i32
    %c0_i32_1 = arith.constant 0 : i32
    return %c0_i32, %c0_i32_0 : i32, i32
  }
  func.func @transform_4(%arg0: i32, %arg1: i32) -> (i32, i32) {
    %c0_i32 = arith.constant 0 : i32
    %c0_i32_0 = arith.constant 0 : i32
    return %arg0, %c0_i32 : i32, i32
  }
  func.func @transform_5(%arg0: i32, %arg1: i32) -> (i32, i32) {
    %c0_i32 = arith.constant 0 : i32
    return %arg0, %arg1 : i32, i32
  }
}

</mosaic_0001>

<llo_original>
// kernel: tpu_custom_call.1
$region0: #{tpu_custom_call.1}
  #allocation0 [shape = 'u32[]', space=smem, size = 0x4, offset = 0x4, fixed_abs, tag = 'smem constant byte address 0x4 - core index']
  #allocation1 [shape = 'u32[72,128]{1,0:T(1,128)}', space=vmem, size = 0x9000, scoped, tag = 'internal scratch']
  #allocation2 [shape = 'f32[2,1]{1,0:T(2,128)}', space=vmem, size = 0x400, scoped, tag = 'scratch operand']
  #allocation3 [shape = 'f32[2,1]{1,0:T(2,128)}', space=vmem, size = 0x400, scoped, tag = 'scratch operand']
  #allocation4 [shape = 'f32[2,32]{1,0:T(2,128)}', space=vmem, size = 0x400, scoped, tag = 'scratch operand']
  %s0 = inlined_call_operand.hbm [shape: f32[2,8,32], index: 0, kind: input, shape index: {}]
  %s1 = inlined_call_operand.hbm [shape: f32[1,32], index: 1, kind: input, shape index: {}]
  %s2 = inlined_call_operand.hbm [shape: f32[32,32], index: 2, kind: input, shape index: {}]
  %s3 = inlined_call_operand.vmem [shape: f32[1,32], index: 3, kind: input, shape index: {}]
  %s4 = inlined_call_operand.hbm [shape: f32[2,32], index: 4, kind: output, shape index: {0}]
  %s5 = inlined_call_operand.hbm [shape: f32[2,8], index: 5, kind: output, shape index: {1}]
  %6 = xla_tuple %s4, %s5
  %s7 = sld [smem:[#allocation0]]
  $region54: #{tpu_custom_call.1} parent=0
    _
  %s9 = ssub.s32 1, %s7
  %s10 = scalar_select 0, %s9, %s7
  $region1: #{tpu_custom_call.1} parent=0
    #allocation5 [shape = 'u8[8192]{0}', space=vmem, size = 0x2000, scoped, tag = 'input window, operand 0, single buffered']
    #allocation6 [shape = 's32[1]{0}', space=sflag, size = 0x4, scoped, tag = 'scoped memory for tpu_custom_call.1']
    #allocation7 [shape = 's32[1]{0}', space=sflag, size = 0x4, scoped, tag = 'scoped memory for tpu_custom_call.1']
    #allocation8 [shape = 'u8[512]{0}', space=vmem, size = 0x400, scoped, tag = 'input window, operand 1, single buffered']
    #allocation9 [shape = 's32[1]{0}', space=sflag, size = 0x4, scoped, tag = 'scoped memory for tpu_custom_call.1']
    #allocation10 [shape = 'u8[16384]{0}', space=vmem, size = 0x4000, scoped, tag = 'input window, operand 2, single buffered']
    #allocation11 [shape = 'u8[1024]{0}', space=vmem, size = 0x400, scoped, tag = 'output window, operand 0, single buffered']
    #allocation12 [shape = 'u8[1024]{0}', space=vmem, size = 0x400, scoped, tag = 'output window, operand 1, single buffered']
    #allocation13 [shape = 's32[1]{0}', space=sflag, size = 0x4, scoped, tag = 'scoped memory for tpu_custom_call.1']
    %11 = vsyncpa [#allocation6], 0
    %12 = vsyncpa [#allocation9], 0
    %13 = vsyncpa [#allocation7], 0
    %14 = vsyncpa [#allocation13], 0
    // Predicated region
    $region2: #{tpu_custom_call.1} parent=1 // pred_check
      _
    $region3: #{tpu_custom_call.1} parent=1 // pred_check_branch
      %16 = sbr.rel (0) target = $region5
    $region4: #{tpu_custom_call.1} parent=1 // pred_region
      %18 = vsyncadd [#allocation6], 0
      %s19 = sshll.u32 %s0, 4
      %s20 = int_to_ptr.hbm [resolvable:$true] %s19
      %s21 = sshll.u32 [#allocation5], 4
      %s22 = int_to_ptr.vmem [resolvable:$true] %s21
      %27 = dma.hbm_to_vmem [thread:$0]  %s20, 256, %s22, [#allocation6], 128, 128, 8
    $region5: #{tpu_custom_call.1} parent=1 // pred_fallthru
      _
    // Predicated region
    $region6: #{tpu_custom_call.1} parent=1 // pred_check
      _
    $region7: #{tpu_custom_call.1} parent=1 // pred_check_branch
      %29 = sbr.rel (0) target = $region9
    $region8: #{tpu_custom_call.1} parent=1 // pred_region
      %31 = vsyncadd [#allocation9], 0
      %s33 = sshll.u32 %s1, 4
      %s34 = int_to_ptr.hbm [resolvable:$true] %s33
      %s35 = sshll.u32 [#allocation8], 4
      %s36 = int_to_ptr.vmem [resolvable:$true] %s35
      %38 = dma.hbm_to_vmem [thread:$0]  %s34, 16, %s36, [#allocation9]
    $region9: #{tpu_custom_call.1} parent=1 // pred_fallthru
      _
    // Predicated region
    $region10: #{tpu_custom_call.1} parent=1 // pred_check
      _
    $region11: #{tpu_custom_call.1} parent=1 // pred_check_branch
      %40 = sbr.rel (0) target = $region13
    $region12: #{tpu_custom_call.1} parent=1 // pred_region
      %42 = vsyncadd [#allocation9], 0
      %s43 = sshll.u32 %s2, 4
      %s44 = int_to_ptr.hbm [resolvable:$true] %s43
      %s45 = sshll.u32 [#allocation10], 4
      %s46 = int_to_ptr.vmem [resolvable:$true] %s45
      %51 = dma.hbm_to_vmem [thread:$0]  %s44, 512, %s46, [#allocation9], 128, 128, 8
    $region13: #{tpu_custom_call.1} parent=1 // pred_fallthru
      _
    // Predicated region
    $region14: #{tpu_custom_call.1} parent=1 // pred_check
      _
    $region15: #{tpu_custom_call.1} parent=1 // pred_check_branch
      %53 = sbr.rel (0) target = $region17
    $region16: #{tpu_custom_call.1} parent=1 // pred_region
      _
    $region17: #{tpu_custom_call.1} parent=1 // pred_fallthru
      _
    // Predicated region
    $region18: #{tpu_custom_call.1} parent=1 // pred_check
      _
    $region19: #{tpu_custom_call.1} parent=1 // pred_check_branch
      %55 = sbr.rel (0) target = $region21
    $region20: #{tpu_custom_call.1} parent=1 // pred_region
      %57 = dma.done [#allocation6], 256
    $region21: #{tpu_custom_call.1} parent=1 // pred_fallthru
      _
    // Predicated region
    $region22: #{tpu_custom_call.1} parent=1 // pred_check
      _
    $region23: #{tpu_custom_call.1} parent=1 // pred_check_branch
      %59 = sbr.rel (0) target = $region25
    $region24: #{tpu_custom_call.1} parent=1 // pred_region
      %61 = dma.done [#allocation9], 16
    $region25: #{tpu_custom_call.1} parent=1 // pred_fallthru
      _
    // Predicated region
    $region26: #{tpu_custom_call.1} parent=1 // pred_check
      _
    $region27: #{tpu_custom_call.1} parent=1 // pred_check_branch
      %63 = sbr.rel (0) target = $region29
    $region28: #{tpu_custom_call.1} parent=1 // pred_region
      %65 = dma.done [#allocation9], 512
    $region29: #{tpu_custom_call.1} parent=1 // pred_fallthru
      _
    %p66 = scmp.eq.s32.totalorder 0, 0
    // Predicated region
    $region30: #{tpu_custom_call.1} parent=1 // pred_check
      %p67 = pneg %p66
    $region31: #{tpu_custom_call.1} parent=1 // pred_check_branch
      %69 = sbr.rel (%p67) target = $region33
    $region32: #{tpu_custom_call.1} parent=1 // pred_region
      %vm70 = vcmask 1024
      %71 = vst.msk [vmem:[#allocation2] sm:$0x3] %vm70, -inf
      %72 = vst.msk [vmem:[#allocation3] sm:$0x3] %vm70, 0.0
      %vm73 = vcmask 254976
      %74 = vst.msk [vmem:[#allocation4] sm:$0x3] %vm73, 0.0
    $region33: #{tpu_custom_call.1} parent=1 // pred_fallthru
      _
    %v75 = vld [vmem:[#allocation5] sm:$0xff]
    %v76 = vld [vmem:[#allocation5 + $0x8] sm:$0xff]
    %v77 = vld [vmem:[#allocation8] sm:$0x1]
    %v79 = vperm.slane %v77, 0
    %v81 = vmul.f32 %v75, %v79
    %v82 = vmul.f32 %v76, %v79
    %vm83 = vcmask 261120
    %v84 = vsel %vm83, %v81, 0.0
    %85 = vadd.xlane.f32.xlu0 %v84
    %v86 = vpop.xlane.xlu0 %85
    %v87 = vsel %vm83, %v82, 0.0
    %88 = vadd.xlane.f32.xlu0 %v87
    %v89 = vpop.xlane.xlu0 %88
    %v92 = vlaneseq
    %v93 = vand.u32 %v92, 127
    %v94 = vperm.slane %v86, %v93
    %v95 = vperm.slane %v89, %v93
    %vm96 = vcmask 1041409
    %v97 = vsel %vm96, %v95, %v94
    %vm99 = vcmask 58368
    %100 = vst.msk [vmem:[#allocation12] sm:$0x3] %vm99, %v97
    %v101 = vld [vmem:[#allocation2] sm:$0x3]
    %v102 = vsel %vm99, %v97, -inf
    %103 = vmax.xlane.f32.xlu0 %v102
    %v104 = vpop.xlane.xlu0 %103
    %v105 = vmax.f32 %v101, %v104
    %v106 = vsub.f32 %v101, %v105
    %v107 = vmul.f32 %v106, 1.442695
    %v108 = vpow.pop %v107
    %110 = vset.pattern.permute.xlu0 0
    %111 = vperm.xlu0 %110, %v105
    %v112 = vpop.permute.xlu0 %111
    %v113 = vperm.slane %v112, 0
    %v114 = vperm.slane %v112, 1
    %v117 = vsub.f32 %v86, %v113
    %v118 = vsub.f32 %v89, %v114
    %v119 = vmul.f32 %v117, 1.442695
    %v120 = vpow.pop %v119
    %v121 = vmul.f32 %v118, 1.442695
    %v122 = vpow.pop %v121
    %v123 = vld [vmem:[#allocation3] sm:$0x3]
    %v124 = vmul.f32 %v108, %v123
    %127 = vset.pattern.permute.xlu0 0
    %128 = vperm.xlu0 %127, %v120
    %v129 = vpop.permute.xlu0 %128
    %130 = vset.pattern.permute.xlu0 0
    %131 = vperm.xlu0 %130, %v122
    %v132 = vpop.permute.xlu0 %131
    %v133 = vperm.slane %v129, %v93
    %v134 = vperm.slane %v132, %v93
    %v135 = vsel %vm96, %v134, %v133
    %v137 = vsel %vm99, %v135, 0.0
    %138 = vadd.xlane.f32.xlu0 %v137
    %v139 = vpop.xlane.xlu0 %138
    %v140 = vadd.f32 %v124, %v139
    %vm141 = vcmask 1024
    %142 = vst.msk [vmem:[#allocation3] sm:$0x3] %vm141, %v140
    %v145 = vmul.f32 %v129, %v75
    %v146 = vmul.f32 %v132, %v76
    %v147 = vld [vmem:[#allocation4] sm:$0x3]
    %149 = vset.pattern.permute.xlu0 0
    %150 = vperm.xlu0 %149, %v108
    %v151 = vpop.permute.xlu0 %150
    %v153 = vmul.f32 %v151, %v147
    %v154 = vsel %vm83, %v145, 0.0
    %v155 = vrot.slane %v154, 4
    %v156 = vadd.f32 %v154, %v155
    %v157 = vrot.slane %v156, 2
    %v158 = vadd.f32 %v156, %v157
    %v159 = vrot.slane %v158, 1
    %v160 = vadd.f32 %v158, %v159
    %v161 = vsel %vm83, %v146, 0.0
    %v162 = vrot.slane %v161, 4
    %v163 = vadd.f32 %v161, %v162
    %v164 = vrot.slane %v163, 2
    %v165 = vadd.f32 %v163, %v164
    %v166 = vrot.slane %v165, 1
    %v167 = vadd.f32 %v165, %v166
    %v170 = vsel %vm96, %v167, %v160
    %v172 = vadd.f32 %v153, %v170
    %vm173 = vcmask 254976
    %174 = vst.msk [vmem:[#allocation4] sm:$0x3] %vm173, %v172
    %175 = vst.msk [vmem:[#allocation2] sm:$0x3] %vm141, %v105
    // Predicated region
    $region34: #{tpu_custom_call.1} parent=1 // pred_check
      %p176 = pneg %p66
    $region35: #{tpu_custom_call.1} parent=1 // pred_check_branch
      %178 = sbr.rel (%p176) target = $region37
    $region36: #{tpu_custom_call.1} parent=1 // pred_region
      %v179 = vld [vmem:[#allocation4] sm:$0x3]
      %v180 = vld [vmem:[#allocation3] sm:$0x3]
      %v181 = vrcp.pop %v180
      %v182 = vmul.f32 %v180, %v181
      %v183 = vsub.f32 1.0, %v182
      %v184 = vmul.f32 %v181, %v183
      %v185 = vadd.f32 %v181, %v184
      %vm186 = vweird.f32 %v180
      %vm187 = vweird.f32 %v181
      %vm188 = vmor %vm186, %vm187
      %v189 = vsel %vm188, %v181, %v185
      %v190 = vand.u32 2147483647, %v180
      %vm191 = vcmp.eq.f32.partialorder %v190, 8.507059e+37
      %v192 = vand.u32 %v180, 2147483648
      %v193 = vor.u32 1.1754944e-38, %v192
      %v194 = vsel %vm191, %v193, %v189
      %v195 = vmul.f32 1.0, %v194
      %197 = vset.pattern.permute.xlu0 0
      %198 = vperm.xlu0 %197, %v195
      %v199 = vpop.permute.xlu0 %198
      %v201 = vmul.f32 %v179, %v199
      %v202 = vld [vmem:[#allocation10] sm:$0xff]
      %v203 = vld [vmem:[#allocation10 + $0x8] sm:$0xff]
      %v204 = vld [vmem:[#allocation10 + $0x10] sm:$0xff]
      %v205 = vld [vmem:[#allocation10 + $0x18] sm:$0xff]
      %v206 = vld [vmem:[%s3] sm:$0x1]
      %v208 = vperm.slane %v206, 0
      %v211 = vsel %vm83, %v201, 0
      %213 = vmatpush.msra.mxu0 0.0
      %214 = vmatpush.msra.mxu0 0.0
      %215 = vmatpush.msra.mxu0 0.0
      %216 = vmatpush.msra.mxu0 0.0
      %217 = vmatpush.msra.mxu0 0.0
      %218 = vmatpush.msra.mxu0 0.0
      %219 = vmatpush.msra.mxu0 0.0
      %220 = vmatpush.msra.mxu0 0.0
      %221 = vmatpush.msra.mxu0 0.0
      %222 = vmatpush.msra.mxu0 0.0
      %223 = vmatpush.msra.mxu0 0.0
      %224 = vmatpush.msra.mxu0 0.0
      %225 = vmatpush.msra.mxu0 %v205
      %226 = vmatpush.msra.mxu0 %v204
      %227 = vmatpush.msra.mxu0 %v203
      %228 = vmatpush.msra.mxu0 %v202
      %229 = vmatmul.f32.gmra.mxu0 %v211
      %v230 = vpop.f32.mrf.mxu0
      %v231 = vadd.f32 %v208, %v230
      %232 = vdwg.mxu0
      %233 = vst.msk [vmem:[#allocation11] sm:$0x3] %vm173, %v231
    $region37: #{tpu_custom_call.1} parent=1 // pred_fallthru
      _
    // Predicated region
    $region38: #{tpu_custom_call.1} parent=1 // pred_check
      _
    $region39: #{tpu_custom_call.1} parent=1 // pred_check_branch
      %235 = sbr.rel (0) target = $region41
    $region40: #{tpu_custom_call.1} parent=1 // pred_region
      %237 = vsyncadd [#allocation7], 0
      %s239 = sshll.u32 [#allocation11], 4
      %s240 = int_to_ptr.vmem [resolvable:$true] %s239
      %s241 = sshll.u32 %s4, 4
      %s242 = int_to_ptr.hbm [resolvable:$true] %s241
      %244 = dma.vmem_to_hbm [thread:$0]  %s240, 32, %s242, [#allocation7]
    $region41: #{tpu_custom_call.1} parent=1 // pred_fallthru
      _
    // Predicated region
    $region42: #{tpu_custom_call.1} parent=1 // pred_check
      _
    $region43: #{tpu_custom_call.1} parent=1 // pred_check_branch
      %246 = sbr.rel (0) target = $region45
    $region44: #{tpu_custom_call.1} parent=1 // pred_region
      %248 = vsyncadd [#allocation13], 0
      %s250 = sshll.u32 [#allocation12], 4
      %s251 = int_to_ptr.vmem [resolvable:$true] %s250
      %s252 = sshll.u32 %s5, 4
      %s253 = int_to_ptr.hbm [resolvable:$true] %s252
      %255 = dma.vmem_to_hbm [thread:$0]  %s251, 32, %s253, [#allocation13]
    $region45: #{tpu_custom_call.1} parent=1 // pred_fallthru
      _
    // Predicated region
    $region46: #{tpu_custom_call.1} parent=1 // pred_check
      _
    $region47: #{tpu_custom_call.1} parent=1 // pred_check_branch
      %257 = sbr.rel (0) target = $region49
    $region48: #{tpu_custom_call.1} parent=1 // pred_region
      %259 = dma.done [#allocation7], 32
    $region49: #{tpu_custom_call.1} parent=1 // pred_fallthru
      _
    // Predicated region
    $region50: #{tpu_custom_call.1} parent=1 // pred_check
      _
    $region51: #{tpu_custom_call.1} parent=1 // pred_check_branch
      %261 = sbr.rel (0) target = $region53
    $region52: #{tpu_custom_call.1} parent=1 // pred_region
      %263 = dma.done [#allocation13], 32
    $region53: #{tpu_custom_call.1} parent=1 // pred_fallthru
      _
    %264 = vsyncpa [#allocation6], 1
    %265 = vsyncpa [#allocation9], 1
    %266 = vsyncpa [#allocation7], 1
    %267 = vsyncpa [#allocation13], 1

// kernel: tpu_custom_call.1
$region0: #{tpu_custom_call.1}
  #allocation0 [shape = 'u32[]', space=smem, size = 0x4, offset = 0x4, fixed_abs, tag = 'smem constant byte address 0x4 - core index']
  #allocation1 [shape = 'u32[72,128]{1,0:T(1,128)}', space=vmem, size = 0x9000, scoped, tag = 'internal scratch']
  #allocation2 [shape = 'f32[2,1]{1,0:T(2,128)}', space=vmem, size = 0x400, scoped, tag = 'scratch operand']
  #allocation3 [shape = 'f32[2,1]{1,0:T(2,128)}', space=vmem, size = 0x400, scoped, tag = 'scratch operand']
  #allocation4 [shape = 'f32[2,32]{1,0:T(2,128)}', space=vmem, size = 0x400, scoped, tag = 'scratch operand']
  %s0 = inlined_call_operand.hbm [shape: f32[2,8,32], index: 0, kind: input, shape index: {}]
  %s1 = inlined_call_operand.hbm [shape: f32[1,32], index: 1, kind: input, shape index: {}]
  %s2 = inlined_call_operand.hbm [shape: f32[32,32], index: 2, kind: input, shape index: {}]
  %s3 = inlined_call_operand.vmem [shape: f32[1,32], index: 3, kind: input, shape index: {}]
  %s4 = inlined_call_operand.hbm [shape: f32[2,32], index: 4, kind: output, shape index: {0}]
  %s5 = inlined_call_operand.hbm [shape: f32[2,8], index: 5, kind: output, shape index: {1}]
  %6 = xla_tuple %s4, %s5
  %s7 = sld [smem:[#allocation0]]
  $region54: #{tpu_custom_call.1} parent=0
    _
  %s9 = ssub.s32 1, %s7
  %s10 = scalar_select 0, %s9, %s7
  $region1: #{tpu_custom_call.1} parent=0
    #allocation5 [shape = 'u8[8192]{0}', space=vmem, size = 0x2000, scoped, tag = 'input window, operand 0, single buffered']
    #allocation6 [shape = 's32[1]{0}', space=sflag, size = 0x4, scoped, tag = 'scoped memory for tpu_custom_call.1']
    #allocation7 [shape = 's32[1]{0}', space=sflag, size = 0x4, scoped, tag = 'scoped memory for tpu_custom_call.1']
    #allocation8 [shape = 'u8[512]{0}', space=vmem, size = 0x400, scoped, tag = 'input window, operand 1, single buffered']
    #allocation9 [shape = 's32[1]{0}', space=sflag, size = 0x4, scoped, tag = 'scoped memory for tpu_custom_call.1']
    #allocation10 [shape = 'u8[16384]{0}', space=vmem, size = 0x4000, scoped, tag = 'input window, operand 2, single buffered']
    #allocation11 [shape = 'u8[1024]{0}', space=vmem, size = 0x400, scoped, tag = 'output window, operand 0, single buffered']
    #allocation12 [shape = 'u8[1024]{0}', space=vmem, size = 0x400, scoped, tag = 'output window, operand 1, single buffered']
    #allocation13 [shape = 's32[1]{0}', space=sflag, size = 0x4, scoped, tag = 'scoped memory for tpu_custom_call.1']
    %11 = vsyncpa [#allocation6], 0
    %12 = vsyncpa [#allocation9], 0
    %13 = vsyncpa [#allocation7], 0
    %14 = vsyncpa [#allocation13], 0
    // Predicated region
    $region2: #{tpu_custom_call.1} parent=1 // pred_check
      _
    $region3: #{tpu_custom_call.1} parent=1 // pred_check_branch
      %16 = sbr.rel (0) target = $region5
    $region4: #{tpu_custom_call.1} parent=1 // pred_region
      %18 = vsyncadd [#allocation6], 0
      %s19 = sshll.u32 %s0, 4
      %s20 = int_to_ptr.hbm [resolvable:$true] %s19
      %s21 = sshll.u32 [#allocation5], 4
      %s22 = int_to_ptr.vmem [resolvable:$true] %s21
      %27 = dma.hbm_to_vmem [thread:$0]  %s20, 256, %s22, [#allocation6], 128, 128, 8
    $region5: #{tpu_custom_call.1} parent=1 // pred_fallthru
      _
    // Predicated region
    $region6: #{tpu_custom_call.1} parent=1 // pred_check
      _
    $region7: #{tpu_custom_call.1} parent=1 // pred_check_branch
      %29 = sbr.rel (0) target = $region9
    $region8: #{tpu_custom_call.1} parent=1 // pred_region
      %31 = vsyncadd [#allocation9], 0
      %s33 = sshll.u32 %s1, 4
      %s34 = int_to_ptr.hbm [resolvable:$true] %s33
      %s35 = sshll.u32 [#allocation8], 4
      %s36 = int_to_ptr.vmem [resolvable:$true] %s35
      %38 = dma.hbm_to_vmem [thread:$0]  %s34, 16, %s36, [#allocation9]
    $region9: #{tpu_custom_call.1} parent=1 // pred_fallthru
      _
    // Predicated region
    $region10: #{tpu_custom_call.1} parent=1 // pred_check
      _
    $region11: #{tpu_custom_call.1} parent=1 // pred_check_branch
      %40 = sbr.rel (0) target = $region13
    $region12: #{tpu_custom_call.1} parent=1 // pred_region
      %42 = vsyncadd [#allocation9], 0
      %s43 = sshll.u32 %s2, 4
      %s44 = int_to_ptr.hbm [resolvable:$true] %s43
      %s45 = sshll.u32 [#allocation10], 4
      %s46 = int_to_ptr.vmem [resolvable:$true] %s45
      %51 = dma.hbm_to_vmem [thread:$0]  %s44, 512, %s46, [#allocation9], 128, 128, 8
    $region13: #{tpu_custom_call.1} parent=1 // pred_fallthru
      _
    // Predicated region
    $region14: #{tpu_custom_call.1} parent=1 // pred_check
      _
    $region15: #{tpu_custom_call.1} parent=1 // pred_check_branch
      %53 = sbr.rel (0) target = $region17
    $region16: #{tpu_custom_call.1} parent=1 // pred_region
      _
    $region17: #{tpu_custom_call.1} parent=1 // pred_fallthru
      _
    // Predicated region
    $region18: #{tpu_custom_call.1} parent=1 // pred_check
      _
    $region19: #{tpu_custom_call.1} parent=1 // pred_check_branch
      %55 = sbr.rel (0) target = $region21
    $region20: #{tpu_custom_call.1} parent=1 // pred_region
      %57 = dma.done [#allocation6], 256
    $region21: #{tpu_custom_call.1} parent=1 // pred_fallthru
      _
    // Predicated region
    $region22: #{tpu_custom_call.1} parent=1 // pred_check
      _
    $region23: #{tpu_custom_call.1} parent=1 // pred_check_branch
      %59 = sbr.rel (0) target = $region25
    $region24: #{tpu_custom_call.1} parent=1 // pred_region
      %61 = dma.done [#allocation9], 16
    $region25: #{tpu_custom_call.1} parent=1 // pred_fallthru
      _
    // Predicated region
    $region26: #{tpu_custom_call.1} parent=1 // pred_check
      _
    $region27: #{tpu_custom_call.1} parent=1 // pred_check_branch
      %63 = sbr.rel (0) target = $region29
    $region28: #{tpu_custom_call.1} parent=1 // pred_region
      %65 = dma.done [#allocation9], 512
    $region29: #{tpu_custom_call.1} parent=1 // pred_fallthru
      _
    %p66 = scmp.eq.s32.totalorder 0, 0
    // Predicated region
    $region30: #{tpu_custom_call.1} parent=1 // pred_check
      %p67 = pneg %p66
    $region31: #{tpu_custom_call.1} parent=1 // pred_check_branch
      %69 = sbr.rel (%p67) target = $region33
    $region32: #{tpu_custom_call.1} parent=1 // pred_region
      %vm70 = vcmask 1024
      %71 = vst.msk [vmem:[#allocation2] sm:$0x3] %vm70, -inf
      %72 = vst.msk [vmem:[#allocation3] sm:$0x3] %vm70, 0.0
      %vm73 = vcmask 254976
      %74 = vst.msk [vmem:[#allocation4] sm:$0x3] %vm73, 0.0
    $region33: #{tpu_custom_call.1} parent=1 // pred_fallthru
      _
    %v75 = vld [vmem:[#allocation5] sm:$0xff]
    %v76 = vld [vmem:[#allocation5 + $0x8] sm:$0xff]
    %v77 = vld [vmem:[#allocation8] sm:$0x1]
    %v79 = vperm.slane %v77, 0
    %v81 = vmul.f32 %v75, %v79
    %v82 = vmul.f32 %v76, %v79
    %vm83 = vcmask 261120
    %v84 = vsel %vm83, %v81, 0.0
    %85 = vadd.xlane.f32.xlu0 %v84
    %v86 = vpop.xlane.xlu0 %85
    %v87 = vsel %vm83, %v82, 0.0
    %88 = vadd.xlane.f32.xlu0 %v87
    %v89 = vpop.xlane.xlu0 %88
    %v92 = vlaneseq
    %v93 = vand.u32 %v92, 127
    %v94 = vperm.slane %v86, %v93
    %v95 = vperm.slane %v89, %v93
    %vm96 = vcmask 1041409
    %v97 = vsel %vm96, %v95, %v94
    %vm99 = vcmask 58368
    %100 = vst.msk [vmem:[#allocation12] sm:$0x3] %vm99, %v97
    %v101 = vld [vmem:[#allocation2] sm:$0x3]
    %v102 = vsel %vm99, %v97, -inf
    %103 = vmax.xlane.f32.xlu0 %v102
    %v104 = vpop.xlane.xlu0 %103
    %v105 = vmax.f32 %v101, %v104
    %v106 = vsub.f32 %v101, %v105
    %v107 = vmul.f32 %v106, 1.442695
    %v108 = vpow.pop %v107
    %110 = vset.pattern.permute.xlu0 0
    %111 = vperm.xlu0 %110, %v105
    %v112 = vpop.permute.xlu0 %111
    %v113 = vperm.slane %v112, 0
    %v114 = vperm.slane %v112, 1
    %v117 = vsub.f32 %v86, %v113
    %v118 = vsub.f32 %v89, %v114
    %v119 = vmul.f32 %v117, 1.442695
    %v120 = vpow.pop %v119
    %v121 = vmul.f32 %v118, 1.442695
    %v122 = vpow.pop %v121
    %v123 = vld [vmem:[#allocation3] sm:$0x3]
    %v124 = vmul.f32 %v108, %v123
    %127 = vset.pattern.permute.xlu0 0
    %128 = vperm.xlu0 %127, %v120
    %v129 = vpop.permute.xlu0 %128
    %130 = vset.pattern.permute.xlu0 0
    %131 = vperm.xlu0 %130, %v122
    %v132 = vpop.permute.xlu0 %131
    %v133 = vperm.slane %v129, %v93
    %v134 = vperm.slane %v132, %v93
    %v135 = vsel %vm96, %v134, %v133
    %v137 = vsel %vm99, %v135, 0.0
    %138 = vadd.xlane.f32.xlu0 %v137
    %v139 = vpop.xlane.xlu0 %138
    %v140 = vadd.f32 %v124, %v139
    %vm141 = vcmask 1024
    %142 = vst.msk [vmem:[#allocation3] sm:$0x3] %vm141, %v140
    %v145 = vmul.f32 %v129, %v75
    %v146 = vmul.f32 %v132, %v76
    %v147 = vld [vmem:[#allocation4] sm:$0x3]
    %149 = vset.pattern.permute.xlu0 0
    %150 = vperm.xlu0 %149, %v108
    %v151 = vpop.permute.xlu0 %150
    %v153 = vmul.f32 %v151, %v147
    %v154 = vsel %vm83, %v145, 0.0
    %v155 = vrot.slane %v154, 4
    %v156 = vadd.f32 %v154, %v155
    %v157 = vrot.slane %v156, 2
    %v158 = vadd.f32 %v156, %v157
    %v159 = vrot.slane %v158, 1
    %v160 = vadd.f32 %v158, %v159
    %v161 = vsel %vm83, %v146, 0.0
    %v162 = vrot.slane %v161, 4
    %v163 = vadd.f32 %v161, %v162
    %v164 = vrot.slane %v163, 2
    %v165 = vadd.f32 %v163, %v164
    %v166 = vrot.slane %v165, 1
    %v167 = vadd.f32 %v165, %v166
    %v170 = vsel %vm96, %v167, %v160
    %v172 = vadd.f32 %v153, %v170
    %vm173 = vcmask 254976
    %174 = vst.msk [vmem:[#allocation4] sm:$0x3] %vm173, %v172
    %175 = vst.msk [vmem:[#allocation2] sm:$0x3] %vm141, %v105
    // Predicated region
    $region34: #{tpu_custom_call.1} parent=1 // pred_check
      %p176 = pneg %p66
    $region35: #{tpu_custom_call.1} parent=1 // pred_check_branch
      %178 = sbr.rel (%p176) target = $region37
    $region36: #{tpu_custom_call.1} parent=1 // pred_region
      %v179 = vld [vmem:[#allocation4] sm:$0x3]
      %v180 = vld [vmem:[#allocation3] sm:$0x3]
      %v181 = vrcp.pop %v180
      %v182 = vmul.f32 %v180, %v181
      %v183 = vsub.f32 1.0, %v182
      %v184 = vmul.f32 %v181, %v183
      %v185 = vadd.f32 %v181, %v184
      %vm186 = vweird.f32 %v180
      %vm187 = vweird.f32 %v181
      %vm188 = vmor %vm186, %vm187
      %v189 = vsel %vm188, %v181, %v185
      %v190 = vand.u32 2147483647, %v180
      %vm191 = vcmp.eq.f32.partialorder %v190, 8.507059e+37
      %v192 = vand.u32 %v180, 2147483648
      %v193 = vor.u32 1.1754944e-38, %v192
      %v194 = vsel %vm191, %v193, %v189
      %v195 = vmul.f32 1.0, %v194
      %197 = vset.pattern.permute.xlu0 0
      %198 = vperm.xlu0 %197, %v195
      %v199 = vpop.permute.xlu0 %198
      %v201 = vmul.f32 %v179, %v199
      %v202 = vld [vmem:[#allocation10] sm:$0xff]
      %v203 = vld [vmem:[#allocation10 + $0x8] sm:$0xff]
      %v204 = vld [vmem:[#allocation10 + $0x10] sm:$0xff]
      %v205 = vld [vmem:[#allocation10 + $0x18] sm:$0xff]
      %v206 = vld [vmem:[%s3] sm:$0x1]
      %v208 = vperm.slane %v206, 0
      %v211 = vsel %vm83, %v201, 0
      %213 = vmatpush.msra.mxu0 0.0
      %214 = vmatpush.msra.mxu0 0.0
      %215 = vmatpush.msra.mxu0 0.0
      %216 = vmatpush.msra.mxu0 0.0
      %217 = vmatpush.msra.mxu0 0.0
      %218 = vmatpush.msra.mxu0 0.0
      %219 = vmatpush.msra.mxu0 0.0
      %220 = vmatpush.msra.mxu0 0.0
      %221 = vmatpush.msra.mxu0 0.0
      %222 = vmatpush.msra.mxu0 0.0
      %223 = vmatpush.msra.mxu0 0.0
      %224 = vmatpush.msra.mxu0 0.0
      %225 = vmatpush.msra.mxu0 %v205
      %226 = vmatpush.msra.mxu0 %v204
      %227 = vmatpush.msra.mxu0 %v203
      %228 = vmatpush.msra.mxu0 %v202
      %229 = vmatmul.f32.gmra.mxu0 %v211
      %v230 = vpop.f32.mrf.mxu0
      %v231 = vadd.f32 %v208, %v230
      %232 = vdwg.mxu0
      %233 = vst.msk [vmem:[#allocation11] sm:$0x3] %vm173, %v231
    $region37: #{tpu_custom_call.1} parent=1 // pred_fallthru
      _
    // Predicated region
    $region38: #{tpu_custom_call.1} parent=1 // pred_check
      _
    $region39: #{tpu_custom_call.1} parent=1 // pred_check_branch
      %235 = sbr.rel (0) target = $region41
    $region40: #{tpu_custom_call.1} parent=1 // pred_region
      %237 = vsyncadd [#allocation7], 0
      %s239 = sshll.u32 [#allocation11], 4
      %s240 = int_to_ptr.vmem [resolvable:$true] %s239
      %s241 = sshll.u32 %s4, 4
      %s242 = int_to_ptr.hbm [resolvable:$true] %s241
      %244 = dma.vmem_to_hbm [thread:$0]  %s240, 32, %s242, [#allocation7]
    $region41: #{tpu_custom_call.1} parent=1 // pred_fallthru
      _
    // Predicated region
    $region42: #{tpu_custom_call.1} parent=1 // pred_check
      _
    $region43: #{tpu_custom_call.1} parent=1 // pred_check_branch
      %246 = sbr.rel (0) target = $region45
    $region44: #{tpu_custom_call.1} parent=1 // pred_region
      %248 = vsyncadd [#allocation13], 0
      %s250 = sshll.u32 [#allocation12], 4
      %s251 = int_to_ptr.vmem [resolvable:$true] %s250
      %s252 = sshll.u32 %s5, 4
      %s253 = int_to_ptr.hbm [resolvable:$true] %s252
      %255 = dma.vmem_to_hbm [thread:$0]  %s251, 32, %s253, [#allocation13]
    $region45: #{tpu_custom_call.1} parent=1 // pred_fallthru
      _
    // Predicated region
    $region46: #{tpu_custom_call.1} parent=1 // pred_check
      _
    $region47: #{tpu_custom_call.1} parent=1 // pred_check_branch
      %257 = sbr.rel (0) target = $region49
    $region48: #{tpu_custom_call.1} parent=1 // pred_region
      %259 = dma.done [#allocation7], 32
    $region49: #{tpu_custom_call.1} parent=1 // pred_fallthru
      _
    // Predicated region
    $region50: #{tpu_custom_call.1} parent=1 // pred_check
      _
    $region51: #{tpu_custom_call.1} parent=1 // pred_check_branch
      %261 = sbr.rel (0) target = $region53
    $region52: #{tpu_custom_call.1} parent=1 // pred_region
      %263 = dma.done [#allocation13], 32
    $region53: #{tpu_custom_call.1} parent=1 // pred_fallthru
      _
    %264 = vsyncpa [#allocation6], 1
    %265 = vsyncpa [#allocation9], 1
    %266 = vsyncpa [#allocation7], 1
    %267 = vsyncpa [#allocation13], 1

</llo_original>
